<compile_context>
chip_gen: v7x
topology: tpu7x:2x2x1
jax: 0.10.0
libtpu: 0.0.40
codegen_flags: <defaults>
</compile_context>

<pallas_src>
import functools

import jax
import jax.numpy as jnp
from jax import lax
from jax.experimental import pallas as pl
from jax.experimental.pallas import tpu as pltpu

TAU = 10.0
INV_TAU = float(1.0 / TAU)
V_TH = 1.0
ALPHA = 0.6
BN_EPS = 1e-5


def _tim_kernel(x_ref, w_ref, b_ref, o_ref, *, T, alpha):
    """Full T-step recurrence for one batch tile.

    x_ref / o_ref : (T, TB, C)  input sequence / output states for this batch tile
    w_ref         : (C, C)      BN-folded center-tap conv weight, laid out so z = prev @ w
    b_ref         : (1, C)      BN-folded conv bias
    """
    tb, c = o_ref.shape[1], o_ref.shape[2]

    # Loaded once per grid step, reused across all T iterations.
    w = w_ref[...]
    b = b_ref[...]

    inv_tau = jnp.float32(INV_TAU)
    one_m_alpha = jnp.float32(1.0 - alpha)
    alpha_f = jnp.float32(alpha)

    prev0 = jnp.zeros((tb, c), jnp.float32)   # previous interaction state
    v0 = jnp.zeros((tb, c), jnp.float32)      # LIF membrane potential

    def step(t, carry):
        prev, v = carry
        # Conv1d(k=3, pad=1) on a length-1 state == single center-tap matmul;
        # eval-mode BatchNorm is already folded into w / b.
        z = jnp.dot(prev, w, preferred_element_type=jnp.float32) + b
        # LIF neuron (decay_input=True, hard reset to v_reset=0).
        v_new = v + (z - v) * inv_tau
        spike = jnp.where(v_new >= V_TH, 1.0, 0.0)
        v_out = (1.0 - spike) * v_new
        # Temporal interaction: new_state = (1-alpha)*x_t + alpha*spike.
        new_state = one_m_alpha * x_ref[t] + alpha_f * spike
        o_ref[t] = new_state.astype(o_ref.dtype)   # one full-width row-slab store
        return new_state, v_out

    lax.fori_loop(0, T, step, (prev0, v0), unroll=(T <= 16))


def _pick_batch_tile(B, T, C):
    """Batch-tile size: keep >=2 parallel grid steps (megacore) when the batch can be
    tiled at f32 sublane granularity (multiples of 8) and the tile divides B, while
    keeping the double-buffered (T, TB, C) in+out blocks inside a conservative VMEM
    budget (sized for v7x's 64 MiB physical VMEM)."""
    if B % 16 != 0:
        return B  # too small to tile along sublanes -> one tile covering the batch
    budget = 8 * 1024 * 1024  # bytes for in+out blocks, double-buffered
    best, tb = 8, 8
    while tb <= B // 2:
        if B % tb == 0 and 4 * (T * tb * C * 4) <= budget:
            best = tb
        tb += 8
    return best


def temporal_interaction(x, params, alpha=ALPHA):
    """x: (T, B, C) float32.  params: conv weight (C,C,3), bias (C,), BN gamma/beta/mean/var.
    Returns (T, B, C) float32 — same layout as the PyTorch module output."""
    T, B, C = x.shape

    # Fold eval-mode BN + conv bias into the center-tap weight/bias.
    scale = params["gamma"] / jnp.sqrt(params["var"] + BN_EPS)
    w_center = params["w"][:, :, 1]                                       # (Cout, Cin)
    w_eff = jnp.transpose(w_center * scale[:, None]).astype(jnp.float32)  # (Cin, Cout)
    b_eff = ((params["b"] - params["mean"]) * scale
             + params["beta"]).astype(jnp.float32).reshape(1, C)

    TB = _pick_batch_tile(B, T, C)
    grid = (B // TB,)

    kernel = functools.partial(_tim_kernel, T=T, alpha=alpha)

    out = pl.pallas_call(
        kernel,
        out_shape=jax.ShapeDtypeStruct((T, B, C), jnp.float32),
        grid_spec=pltpu.PrefetchScalarGridSpec(
            num_scalar_prefetch=0,
            grid=grid,
            in_specs=[
                pl.BlockSpec((T, TB, C), lambda i: (0, i, 0)),   # whole sequence per tile
                pl.BlockSpec((C, C), lambda i: (0, 0)),
                pl.BlockSpec((1, C), lambda i: (0, 0)),
            ],
            out_specs=pl.BlockSpec((T, TB, C), lambda i: (0, i, 0)),
        ),
        compiler_params=pltpu.CompilerParams(dimension_semantics=("parallel",)),
    )(x.astype(jnp.float32), w_eff, b_eff)
    return out


def ref_forward(x, params, alpha=ALPHA):
    """Pure-jnp reference mirroring the PyTorch forward (eval-mode BN, fresh LIF state)."""
    T, B, C = x.shape
    scale = params["gamma"] / jnp.sqrt(params["var"] + BN_EPS)
    w_center = params["w"][:, :, 1]
    inv_tau = jnp.float32(INV_TAU)
    prev = jnp.zeros((B, C), jnp.float32)
    v = jnp.zeros((B, C), jnp.float32)
    outs = []
    for t in range(T):
        # Conv1d(k=3, padding=1) on the length-1 state -> center tap only.
        z = jnp.dot(prev, w_center.T, precision=jax.lax.Precision.HIGHEST) + params["b"]
        # BatchNorm1d (eval mode).
        z = (z - params["mean"]) * scale + params["beta"]
        # LIF: charge, fire (heaviside), hard reset.
        v = v + (z - v) * inv_tau
        s = (v >= V_TH).astype(jnp.float32)
        v = (1.0 - s) * v
        new = (1.0 - alpha) * x[t] + alpha * s
        outs.append(new)
        prev = new
    return jnp.stack(outs, axis=0)


def make_params(key, channels, k=3):
    k1, k2, k3, k4, k5, k6 = jax.random.split(key, 6)
    bound = 1.0 / (channels * k) ** 0.5
    return dict(
        w=jax.random.uniform(k1, (channels, channels, k), jnp.float32, -bound, bound),
        b=jax.random.uniform(k2, (channels,), jnp.float32, -bound, bound),
        gamma=jax.random.uniform(k3, (channels,), jnp.float32, 2.0, 6.0),
        beta=jax.random.uniform(k4, (channels,), jnp.float32, -0.5, 0.5),
        mean=jax.random.normal(k5, (channels,), jnp.float32) * 0.1,
        var=jax.random.uniform(k6, (channels,), jnp.float32, 0.5, 1.5),
    )


if __name__ == "__main__":
    T, B, C = 8, 2, 4
    key = jax.random.PRNGKey(0)
    kx, kp = jax.random.split(key)
    x = jax.random.normal(kx, (T, B, C), jnp.float32)   # (seq, batch, channels)
    params = make_params(kp, C)

    out = jax.block_until_ready(temporal_interaction(x, params))
    ref = jax.block_until_ready(ref_forward(x, params))

    assert out.shape == (T, B, C), out.shape
    assert jnp.allclose(out, ref, atol=1e-5), float(jnp.max(jnp.abs(out - ref)))
    print("KERNEL_OK")
</pallas_src>

<mosaic_0001>
module attributes {stable_mosaic.version = 11 : i64} {
  func.func @_tim_kernel(%arg0: i32, %arg1: memref<8x2x4xf32, #tpu.memory_space<vmem>>, %arg2: memref<4x4xf32, #tpu.memory_space<vmem>>, %arg3: memref<1x4xf32, #tpu.memory_space<vmem>>, %arg4: memref<8x2x4xf32, #tpu.memory_space<vmem>>) attributes {dimension_semantics = [#tpu.dimension_semantics<parallel>], iteration_bounds = array<i64: 1>, scalar_prefetch = 0 : i64, scratch_operands = 0 : i64, tpu.core_type = #tpu.core_type<tc>, window_params = [{transform_indices = @transform_0, window_bounds = array<i64: 8, 2, 4>}, {pipeline_mode = #tpu.pipeline_mode<synchronous>, transform_indices = @transform_1, window_bounds = array<i64: 4, 4>}, {pipeline_mode = #tpu.pipeline_mode<synchronous>, transform_indices = @transform_2, window_bounds = array<i64: 1, 4>}, {transform_indices = @transform_3, window_bounds = array<i64: 8, 2, 4>}]} {
    %c0 = arith.constant 0 : index
    %c0_0 = arith.constant 0 : index
    %0 = vector.load %arg2[%c0, %c0_0] : memref<4x4xf32, #tpu.memory_space<vmem>>, vector<4x4xf32>
    %c0_1 = arith.constant 0 : index
    %c0_2 = arith.constant 0 : index
    %1 = vector.load %arg3[%c0_1, %c0_2] : memref<1x4xf32, #tpu.memory_space<vmem>>, vector<1x4xf32>
    %cst = arith.constant 0.000000e+00 : f32
    %2 = vector.broadcast %cst : f32 to vector<2x4xf32>
    %cst_3 = arith.constant 0.000000e+00 : f32
    %3 = vector.broadcast %cst_3 : f32 to vector<2x4xf32>
    %cst_4 = arith.constant 1.000000e-01 : f32
    %cst_5 = arith.constant 4.000000e-01 : f32
    %cst_6 = arith.constant 6.000000e-01 : f32
    %c0_i32 = arith.constant 0 : i32
    %cst_7 = arith.constant dense<0.000000e+00> : vector<2x4xf32>
    %4 = tpu.matmul %2, %0, %cst_7 {dimension_numbers = #tpu.dot_dimension_numbers<[1], [0], [0], [1], [0, 0, 1, 1], [], []>} : vector<2x4xf32>, vector<4x4xf32>, vector<2x4xf32> -> vector<2x4xf32>
    %5 = vector.broadcast %1 : vector<1x4xf32> to vector<2x4xf32>
    %6 = arith.addf %4, %5 : vector<2x4xf32>
    %7 = arith.subf %6, %3 : vector<2x4xf32>
    %8 = vector.broadcast %cst_4 : f32 to vector<2x4xf32>
    %9 = arith.mulf %7, %8 : vector<2x4xf32>
    %10 = arith.addf %3, %9 : vector<2x4xf32>
    %cst_8 = arith.constant 1.000000e+00 : f32
    %11 = vector.broadcast %cst_8 : f32 to vector<2x4xf32>
    %12 = arith.cmpf oge, %10, %11 : vector<2x4xf32>
    %cst_9 = arith.constant 1.000000e+00 : f32
    %cst_10 = arith.constant 0.000000e+00 : f32
    %13 = vector.broadcast %cst_9 : f32 to vector<2x4xf32>
    %14 = vector.broadcast %cst_10 : f32 to vector<2x4xf32>
    %15 = arith.select %12, %13, %14 : vector<2x4xi1>, vector<2x4xf32>
    %cst_11 = arith.constant 1.000000e+00 : f32
    %16 = vector.broadcast %cst_11 : f32 to vector<2x4xf32>
    %17 = arith.subf %16, %15 : vector<2x4xf32>
    %18 = arith.mulf %17, %10 : vector<2x4xf32>
    %19 = arith.index_cast %c0_i32 : i32 to index
    %c0_12 = arith.constant 0 : index
    %c0_13 = arith.constant 0 : index
    %20 = vector.load %arg1[%19, %c0_12, %c0_13] : memref<8x2x4xf32, #tpu.memory_space<vmem>>, vector<1x2x4xf32>
    %21 = vector.shape_cast %20 : vector<1x2x4xf32> to vector<2x4xf32>
    %22 = vector.broadcast %cst_5 : f32 to vector<2x4xf32>
    %23 = arith.mulf %22, %21 : vector<2x4xf32>
    %24 = vector.broadcast %cst_6 : f32 to vector<2x4xf32>
    %25 = arith.mulf %24, %15 : vector<2x4xf32>
    %26 = arith.addf %23, %25 : vector<2x4xf32>
    %27 = arith.index_cast %c0_i32 : i32 to index
    %c0_14 = arith.constant 0 : index
    %c0_15 = arith.constant 0 : index
    %28 = vector.load %arg4[%27, %c0_14, %c0_15] : memref<8x2x4xf32, #tpu.memory_space<vmem>>, vector<1x2x4xf32>
    %29 = vector.shape_cast %28 : vector<1x2x4xf32> to vector<2x4xf32>
    %30 = vector.shape_cast %26 : vector<2x4xf32> to vector<1x2x4xf32>
    tpu.vector_store %arg4[%27, %c0_14, %c0_15], %30 {strides = array<i32>} : memref<8x2x4xf32, #tpu.memory_space<vmem>>, vector<1x2x4xf32>,
    %c1_i32 = arith.constant 1 : i32
    %cst_16 = arith.constant dense<0.000000e+00> : vector<2x4xf32>
    %31 = tpu.matmul %26, %0, %cst_16 {dimension_numbers = #tpu.dot_dimension_numbers<[1], [0], [0], [1], [0, 0, 1, 1], [], []>} : vector<2x4xf32>, vector<4x4xf32>, vector<2x4xf32> -> vector<2x4xf32>
    %32 = vector.broadcast %1 : vector<1x4xf32> to vector<2x4xf32>
    %33 = arith.addf %31, %32 : vector<2x4xf32>
    %34 = arith.subf %33, %18 : vector<2x4xf32>
    %35 = vector.broadcast %cst_4 : f32 to vector<2x4xf32>
    %36 = arith.mulf %34, %35 : vector<2x4xf32>
    %37 = arith.addf %18, %36 : vector<2x4xf32>
    %cst_17 = arith.constant 1.000000e+00 : f32
    %38 = vector.broadcast %cst_17 : f32 to vector<2x4xf32>
    %39 = arith.cmpf oge, %37, %38 : vector<2x4xf32>
    %cst_18 = arith.constant 1.000000e+00 : f32
    %cst_19 = arith.constant 0.000000e+00 : f32
    %40 = vector.broadcast %cst_18 : f32 to vector<2x4xf32>
    %41 = vector.broadcast %cst_19 : f32 to vector<2x4xf32>
    %42 = arith.select %39, %40, %41 : vector<2x4xi1>, vector<2x4xf32>
    %cst_20 = arith.constant 1.000000e+00 : f32
    %43 = vector.broadcast %cst_20 : f32 to vector<2x4xf32>
    %44 = arith.subf %43, %42 : vector<2x4xf32>
    %45 = arith.mulf %44, %37 : vector<2x4xf32>
    %46 = arith.index_cast %c1_i32 : i32 to index
    %c0_21 = arith.constant 0 : index
    %c0_22 = arith.constant 0 : index
    %47 = vector.load %arg1[%46, %c0_21, %c0_22] : memref<8x2x4xf32, #tpu.memory_space<vmem>>, vector<1x2x4xf32>
    %48 = vector.shape_cast %47 : vector<1x2x4xf32> to vector<2x4xf32>
    %49 = vector.broadcast %cst_5 : f32 to vector<2x4xf32>
    %50 = arith.mulf %49, %48 : vector<2x4xf32>
    %51 = vector.broadcast %cst_6 : f32 to vector<2x4xf32>
    %52 = arith.mulf %51, %42 : vector<2x4xf32>
    %53 = arith.addf %50, %52 : vector<2x4xf32>
    %54 = arith.index_cast %c1_i32 : i32 to index
    %c0_23 = arith.constant 0 : index
    %c0_24 = arith.constant 0 : index
    %55 = vector.load %arg4[%54, %c0_23, %c0_24] : memref<8x2x4xf32, #tpu.memory_space<vmem>>, vector<1x2x4xf32>
    %56 = vector.shape_cast %55 : vector<1x2x4xf32> to vector<2x4xf32>
    %57 = vector.shape_cast %53 : vector<2x4xf32> to vector<1x2x4xf32>
    tpu.vector_store %arg4[%54, %c0_23, %c0_24], %57 {strides = array<i32>} : memref<8x2x4xf32, #tpu.memory_space<vmem>>, vector<1x2x4xf32>,
    %c2_i32 = arith.constant 2 : i32
    %cst_25 = arith.constant dense<0.000000e+00> : vector<2x4xf32>
    %58 = tpu.matmul %53, %0, %cst_25 {dimension_numbers = #tpu.dot_dimension_numbers<[1], [0], [0], [1], [0, 0, 1, 1], [], []>} : vector<2x4xf32>, vector<4x4xf32>, vector<2x4xf32> -> vector<2x4xf32>
    %59 = vector.broadcast %1 : vector<1x4xf32> to vector<2x4xf32>
    %60 = arith.addf %58, %59 : vector<2x4xf32>
    %61 = arith.subf %60, %45 : vector<2x4xf32>
    %62 = vector.broadcast %cst_4 : f32 to vector<2x4xf32>
    %63 = arith.mulf %61, %62 : vector<2x4xf32>
    %64 = arith.addf %45, %63 : vector<2x4xf32>
    %cst_26 = arith.constant 1.000000e+00 : f32
    %65 = vector.broadcast %cst_26 : f32 to vector<2x4xf32>
    %66 = arith.cmpf oge, %64, %65 : vector<2x4xf32>
    %cst_27 = arith.constant 1.000000e+00 : f32
    %cst_28 = arith.constant 0.000000e+00 : f32
    %67 = vector.broadcast %cst_27 : f32 to vector<2x4xf32>
    %68 = vector.broadcast %cst_28 : f32 to vector<2x4xf32>
    %69 = arith.select %66, %67, %68 : vector<2x4xi1>, vector<2x4xf32>
    %cst_29 = arith.constant 1.000000e+00 : f32
    %70 = vector.broadcast %cst_29 : f32 to vector<2x4xf32>
    %71 = arith.subf %70, %69 : vector<2x4xf32>
    %72 = arith.mulf %71, %64 : vector<2x4xf32>
    %73 = arith.index_cast %c2_i32 : i32 to index
    %c0_30 = arith.constant 0 : index
    %c0_31 = arith.constant 0 : index
    %74 = vector.load %arg1[%73, %c0_30, %c0_31] : memref<8x2x4xf32, #tpu.memory_space<vmem>>, vector<1x2x4xf32>
    %75 = vector.shape_cast %74 : vector<1x2x4xf32> to vector<2x4xf32>
    %76 = vector.broadcast %cst_5 : f32 to vector<2x4xf32>
    %77 = arith.mulf %76, %75 : vector<2x4xf32>
    %78 = vector.broadcast %cst_6 : f32 to vector<2x4xf32>
    %79 = arith.mulf %78, %69 : vector<2x4xf32>
    %80 = arith.addf %77, %79 : vector<2x4xf32>
    %81 = arith.index_cast %c2_i32 : i32 to index
    %c0_32 = arith.constant 0 : index
    %c0_33 = arith.constant 0 : index
    %82 = vector.load %arg4[%81, %c0_32, %c0_33] : memref<8x2x4xf32, #tpu.memory_space<vmem>>, vector<1x2x4xf32>
    %83 = vector.shape_cast %82 : vector<1x2x4xf32> to vector<2x4xf32>
    %84 = vector.shape_cast %80 : vector<2x4xf32> to vector<1x2x4xf32>
    tpu.vector_store %arg4[%81, %c0_32, %c0_33], %84 {strides = array<i32>} : memref<8x2x4xf32, #tpu.memory_space<vmem>>, vector<1x2x4xf32>,
    %c3_i32 = arith.constant 3 : i32
    %cst_34 = arith.constant dense<0.000000e+00> : vector<2x4xf32>
    %85 = tpu.matmul %80, %0, %cst_34 {dimension_numbers = #tpu.dot_dimension_numbers<[1], [0], [0], [1], [0, 0, 1, 1], [], []>} : vector<2x4xf32>, vector<4x4xf32>, vector<2x4xf32> -> vector<2x4xf32>
    %86 = vector.broadcast %1 : vector<1x4xf32> to vector<2x4xf32>
    %87 = arith.addf %85, %86 : vector<2x4xf32>
    %88 = arith.subf %87, %72 : vector<2x4xf32>
    %89 = vector.broadcast %cst_4 : f32 to vector<2x4xf32>
    %90 = arith.mulf %88, %89 : vector<2x4xf32>
    %91 = arith.addf %72, %90 : vector<2x4xf32>
    %cst_35 = arith.constant 1.000000e+00 : f32
    %92 = vector.broadcast %cst_35 : f32 to vector<2x4xf32>
    %93 = arith.cmpf oge, %91, %92 : vector<2x4xf32>
    %cst_36 = arith.constant 1.000000e+00 : f32
    %cst_37 = arith.constant 0.000000e+00 : f32
    %94 = vector.broadcast %cst_36 : f32 to vector<2x4xf32>
    %95 = vector.broadcast %cst_37 : f32 to vector<2x4xf32>
    %96 = arith.select %93, %94, %95 : vector<2x4xi1>, vector<2x4xf32>
    %cst_38 = arith.constant 1.000000e+00 : f32
    %97 = vector.broadcast %cst_38 : f32 to vector<2x4xf32>
    %98 = arith.subf %97, %96 : vector<2x4xf32>
    %99 = arith.mulf %98, %91 : vector<2x4xf32>
    %100 = arith.index_cast %c3_i32 : i32 to index
    %c0_39 = arith.constant 0 : index
    %c0_40 = arith.constant 0 : index
    %101 = vector.load %arg1[%100, %c0_39, %c0_40] : memref<8x2x4xf32, #tpu.memory_space<vmem>>, vector<1x2x4xf32>
    %102 = vector.shape_cast %101 : vector<1x2x4xf32> to vector<2x4xf32>
    %103 = vector.broadcast %cst_5 : f32 to vector<2x4xf32>
    %104 = arith.mulf %103, %102 : vector<2x4xf32>
    %105 = vector.broadcast %cst_6 : f32 to vector<2x4xf32>
    %106 = arith.mulf %105, %96 : vector<2x4xf32>
    %107 = arith.addf %104, %106 : vector<2x4xf32>
    %108 = arith.index_cast %c3_i32 : i32 to index
    %c0_41 = arith.constant 0 : index
    %c0_42 = arith.constant 0 : index
    %109 = vector.load %arg4[%108, %c0_41, %c0_42] : memref<8x2x4xf32, #tpu.memory_space<vmem>>, vector<1x2x4xf32>
    %110 = vector.shape_cast %109 : vector<1x2x4xf32> to vector<2x4xf32>
    %111 = vector.shape_cast %107 : vector<2x4xf32> to vector<1x2x4xf32>
    tpu.vector_store %arg4[%108, %c0_41, %c0_42], %111 {strides = array<i32>} : memref<8x2x4xf32, #tpu.memory_space<vmem>>, vector<1x2x4xf32>,
    %c4_i32 = arith.constant 4 : i32
    %cst_43 = arith.constant dense<0.000000e+00> : vector<2x4xf32>
    %112 = tpu.matmul %107, %0, %cst_43 {dimension_numbers = #tpu.dot_dimension_numbers<[1], [0], [0], [1], [0, 0, 1, 1], [], []>} : vector<2x4xf32>, vector<4x4xf32>, vector<2x4xf32> -> vector<2x4xf32>
    %113 = vector.broadcast %1 : vector<1x4xf32> to vector<2x4xf32>
    %114 = arith.addf %112, %113 : vector<2x4xf32>
    %115 = arith.subf %114, %99 : vector<2x4xf32>
    %116 = vector.broadcast %cst_4 : f32 to vector<2x4xf32>
    %117 = arith.mulf %115, %116 : vector<2x4xf32>
    %118 = arith.addf %99, %117 : vector<2x4xf32>
    %cst_44 = arith.constant 1.000000e+00 : f32
    %119 = vector.broadcast %cst_44 : f32 to vector<2x4xf32>
    %120 = arith.cmpf oge, %118, %119 : vector<2x4xf32>
    %cst_45 = arith.constant 1.000000e+00 : f32
    %cst_46 = arith.constant 0.000000e+00 : f32
    %121 = vector.broadcast %cst_45 : f32 to vector<2x4xf32>
    %122 = vector.broadcast %cst_46 : f32 to vector<2x4xf32>
    %123 = arith.select %120, %121, %122 : vector<2x4xi1>, vector<2x4xf32>
    %cst_47 = arith.constant 1.000000e+00 : f32
    %124 = vector.broadcast %cst_47 : f32 to vector<2x4xf32>
    %125 = arith.subf %124, %123 : vector<2x4xf32>
    %126 = arith.mulf %125, %118 : vector<2x4xf32>
    %127 = arith.index_cast %c4_i32 : i32 to index
    %c0_48 = arith.constant 0 : index
    %c0_49 = arith.constant 0 : index
    %128 = vector.load %arg1[%127, %c0_48, %c0_49] : memref<8x2x4xf32, #tpu.memory_space<vmem>>, vector<1x2x4xf32>
    %129 = vector.shape_cast %128 : vector<1x2x4xf32> to vector<2x4xf32>
    %130 = vector.broadcast %cst_5 : f32 to vector<2x4xf32>
    %131 = arith.mulf %130, %129 : vector<2x4xf32>
    %132 = vector.broadcast %cst_6 : f32 to vector<2x4xf32>
    %133 = arith.mulf %132, %123 : vector<2x4xf32>
    %134 = arith.addf %131, %133 : vector<2x4xf32>
    %135 = arith.index_cast %c4_i32 : i32 to index
    %c0_50 = arith.constant 0 : index
    %c0_51 = arith.constant 0 : index
    %136 = vector.load %arg4[%135, %c0_50, %c0_51] : memref<8x2x4xf32, #tpu.memory_space<vmem>>, vector<1x2x4xf32>
    %137 = vector.shape_cast %136 : vector<1x2x4xf32> to vector<2x4xf32>
    %138 = vector.shape_cast %134 : vector<2x4xf32> to vector<1x2x4xf32>
    tpu.vector_store %arg4[%135, %c0_50, %c0_51], %138 {strides = array<i32>} : memref<8x2x4xf32, #tpu.memory_space<vmem>>, vector<1x2x4xf32>,
    %c5_i32 = arith.constant 5 : i32
    %cst_52 = arith.constant dense<0.000000e+00> : vector<2x4xf32>
    %139 = tpu.matmul %134, %0, %cst_52 {dimension_numbers = #tpu.dot_dimension_numbers<[1], [0], [0], [1], [0, 0, 1, 1], [], []>} : vector<2x4xf32>, vector<4x4xf32>, vector<2x4xf32> -> vector<2x4xf32>
    %140 = vector.broadcast %1 : vector<1x4xf32> to vector<2x4xf32>
    %141 = arith.addf %139, %140 : vector<2x4xf32>
    %142 = arith.subf %141, %126 : vector<2x4xf32>
    %143 = vector.broadcast %cst_4 : f32 to vector<2x4xf32>
    %144 = arith.mulf %142, %143 : vector<2x4xf32>
    %145 = arith.addf %126, %144 : vector<2x4xf32>
    %cst_53 = arith.constant 1.000000e+00 : f32
    %146 = vector.broadcast %cst_53 : f32 to vector<2x4xf32>
    %147 = arith.cmpf oge, %145, %146 : vector<2x4xf32>
    %cst_54 = arith.constant 1.000000e+00 : f32
    %cst_55 = arith.constant 0.000000e+00 : f32
    %148 = vector.broadcast %cst_54 : f32 to vector<2x4xf32>
    %149 = vector.broadcast %cst_55 : f32 to vector<2x4xf32>
    %150 = arith.select %147, %148, %149 : vector<2x4xi1>, vector<2x4xf32>
    %cst_56 = arith.constant 1.000000e+00 : f32
    %151 = vector.broadcast %cst_56 : f32 to vector<2x4xf32>
    %152 = arith.subf %151, %150 : vector<2x4xf32>
    %153 = arith.mulf %152, %145 : vector<2x4xf32>
    %154 = arith.index_cast %c5_i32 : i32 to index
    %c0_57 = arith.constant 0 : index
    %c0_58 = arith.constant 0 : index
    %155 = vector.load %arg1[%154, %c0_57, %c0_58] : memref<8x2x4xf32, #tpu.memory_space<vmem>>, vector<1x2x4xf32>
    %156 = vector.shape_cast %155 : vector<1x2x4xf32> to vector<2x4xf32>
    %157 = vector.broadcast %cst_5 : f32 to vector<2x4xf32>
    %158 = arith.mulf %157, %156 : vector<2x4xf32>
    %159 = vector.broadcast %cst_6 : f32 to vector<2x4xf32>
    %160 = arith.mulf %159, %150 : vector<2x4xf32>
    %161 = arith.addf %158, %160 : vector<2x4xf32>
    %162 = arith.index_cast %c5_i32 : i32 to index
    %c0_59 = arith.constant 0 : index
    %c0_60 = arith.constant 0 : index
    %163 = vector.load %arg4[%162, %c0_59, %c0_60] : memref<8x2x4xf32, #tpu.memory_space<vmem>>, vector<1x2x4xf32>
    %164 = vector.shape_cast %163 : vector<1x2x4xf32> to vector<2x4xf32>
    %165 = vector.shape_cast %161 : vector<2x4xf32> to vector<1x2x4xf32>
    tpu.vector_store %arg4[%162, %c0_59, %c0_60], %165 {strides = array<i32>} : memref<8x2x4xf32, #tpu.memory_space<vmem>>, vector<1x2x4xf32>,
    %c6_i32 = arith.constant 6 : i32
    %cst_61 = arith.constant dense<0.000000e+00> : vector<2x4xf32>
    %166 = tpu.matmul %161, %0, %cst_61 {dimension_numbers = #tpu.dot_dimension_numbers<[1], [0], [0], [1], [0, 0, 1, 1], [], []>} : vector<2x4xf32>, vector<4x4xf32>, vector<2x4xf32> -> vector<2x4xf32>
    %167 = vector.broadcast %1 : vector<1x4xf32> to vector<2x4xf32>
    %168 = arith.addf %166, %167 : vector<2x4xf32>
    %169 = arith.subf %168, %153 : vector<2x4xf32>
    %170 = vector.broadcast %cst_4 : f32 to vector<2x4xf32>
    %171 = arith.mulf %169, %170 : vector<2x4xf32>
    %172 = arith.addf %153, %171 : vector<2x4xf32>
    %cst_62 = arith.constant 1.000000e+00 : f32
    %173 = vector.broadcast %cst_62 : f32 to vector<2x4xf32>
    %174 = arith.cmpf oge, %172, %173 : vector<2x4xf32>
    %cst_63 = arith.constant 1.000000e+00 : f32
    %cst_64 = arith.constant 0.000000e+00 : f32
    %175 = vector.broadcast %cst_63 : f32 to vector<2x4xf32>
    %176 = vector.broadcast %cst_64 : f32 to vector<2x4xf32>
    %177 = arith.select %174, %175, %176 : vector<2x4xi1>, vector<2x4xf32>
    %cst_65 = arith.constant 1.000000e+00 : f32
    %178 = vector.broadcast %cst_65 : f32 to vector<2x4xf32>
    %179 = arith.subf %178, %177 : vector<2x4xf32>
    %180 = arith.mulf %179, %172 : vector<2x4xf32>
    %181 = arith.index_cast %c6_i32 : i32 to index
    %c0_66 = arith.constant 0 : index
    %c0_67 = arith.constant 0 : index
    %182 = vector.load %arg1[%181, %c0_66, %c0_67] : memref<8x2x4xf32, #tpu.memory_space<vmem>>, vector<1x2x4xf32>
    %183 = vector.shape_cast %182 : vector<1x2x4xf32> to vector<2x4xf32>
    %184 = vector.broadcast %cst_5 : f32 to vector<2x4xf32>
    %185 = arith.mulf %184, %183 : vector<2x4xf32>
    %186 = vector.broadcast %cst_6 : f32 to vector<2x4xf32>
    %187 = arith.mulf %186, %177 : vector<2x4xf32>
    %188 = arith.addf %185, %187 : vector<2x4xf32>
    %189 = arith.index_cast %c6_i32 : i32 to index
    %c0_68 = arith.constant 0 : index
    %c0_69 = arith.constant 0 : index
    %190 = vector.load %arg4[%189, %c0_68, %c0_69] : memref<8x2x4xf32, #tpu.memory_space<vmem>>, vector<1x2x4xf32>
    %191 = vector.shape_cast %190 : vector<1x2x4xf32> to vector<2x4xf32>
    %192 = vector.shape_cast %188 : vector<2x4xf32> to vector<1x2x4xf32>
    tpu.vector_store %arg4[%189, %c0_68, %c0_69], %192 {strides = array<i32>} : memref<8x2x4xf32, #tpu.memory_space<vmem>>, vector<1x2x4xf32>,
    %c7_i32 = arith.constant 7 : i32
    %cst_70 = arith.constant dense<0.000000e+00> : vector<2x4xf32>
    %193 = tpu.matmul %188, %0, %cst_70 {dimension_numbers = #tpu.dot_dimension_numbers<[1], [0], [0], [1], [0, 0, 1, 1], [], []>} : vector<2x4xf32>, vector<4x4xf32>, vector<2x4xf32> -> vector<2x4xf32>
    %194 = vector.broadcast %1 : vector<1x4xf32> to vector<2x4xf32>
    %195 = arith.addf %193, %194 : vector<2x4xf32>
    %196 = arith.subf %195, %180 : vector<2x4xf32>
    %197 = vector.broadcast %cst_4 : f32 to vector<2x4xf32>
    %198 = arith.mulf %196, %197 : vector<2x4xf32>
    %199 = arith.addf %180, %198 : vector<2x4xf32>
    %cst_71 = arith.constant 1.000000e+00 : f32
    %200 = vector.broadcast %cst_71 : f32 to vector<2x4xf32>
    %201 = arith.cmpf oge, %199, %200 : vector<2x4xf32>
    %cst_72 = arith.constant 1.000000e+00 : f32
    %cst_73 = arith.constant 0.000000e+00 : f32
    %202 = vector.broadcast %cst_72 : f32 to vector<2x4xf32>
    %203 = vector.broadcast %cst_73 : f32 to vector<2x4xf32>
    %204 = arith.select %201, %202, %203 : vector<2x4xi1>, vector<2x4xf32>
    %cst_74 = arith.constant 1.000000e+00 : f32
    %205 = vector.broadcast %cst_74 : f32 to vector<2x4xf32>
    %206 = arith.subf %205, %204 : vector<2x4xf32>
    %207 = arith.mulf %206, %199 : vector<2x4xf32>
    %208 = arith.index_cast %c7_i32 : i32 to index
    %c0_75 = arith.constant 0 : index
    %c0_76 = arith.constant 0 : index
    %209 = vector.load %arg1[%208, %c0_75, %c0_76] : memref<8x2x4xf32, #tpu.memory_space<vmem>>, vector<1x2x4xf32>
    %210 = vector.shape_cast %209 : vector<1x2x4xf32> to vector<2x4xf32>
    %211 = vector.broadcast %cst_5 : f32 to vector<2x4xf32>
    %212 = arith.mulf %211, %210 : vector<2x4xf32>
    %213 = vector.broadcast %cst_6 : f32 to vector<2x4xf32>
    %214 = arith.mulf %213, %204 : vector<2x4xf32>
    %215 = arith.addf %212, %214 : vector<2x4xf32>
    %216 = arith.index_cast %c7_i32 : i32 to index
    %c0_77 = arith.constant 0 : index
    %c0_78 = arith.constant 0 : index
    %217 = vector.load %arg4[%216, %c0_77, %c0_78] : memref<8x2x4xf32, #tpu.memory_space<vmem>>, vector<1x2x4xf32>
    %218 = vector.shape_cast %217 : vector<1x2x4xf32> to vector<2x4xf32>
    %219 = vector.shape_cast %215 : vector<2x4xf32> to vector<1x2x4xf32>
    tpu.vector_store %arg4[%216, %c0_77, %c0_78], %219 {strides = array<i32>} : memref<8x2x4xf32, #tpu.memory_space<vmem>>, vector<1x2x4xf32>,
    %c8_i32 = arith.constant 8 : i32
    return
  }
  func.func @transform_0(%arg0: i32) -> (i32, i32, i32) {
    %c0_i32 = arith.constant 0 : i32
    %c0_i32_0 = arith.constant 0 : i32
    %c0_i32_1 = arith.constant 0 : i32
    return %c0_i32, %arg0, %c0_i32_0 : i32, i32, i32
  }
  func.func @transform_1(%arg0: i32) -> (i32, i32) {
    %c0_i32 = arith.constant 0 : i32
    %c0_i32_0 = arith.constant 0 : i32
    %c0_i32_1 = arith.constant 0 : i32
    return %c0_i32, %c0_i32_0 : i32, i32
  }
  func.func @transform_2(%arg0: i32) -> (i32, i32) {
    %c0_i32 = arith.constant 0 : i32
    %c0_i32_0 = arith.constant 0 : i32
    %c0_i32_1 = arith.constant 0 : i32
    return %c0_i32, %c0_i32_0 : i32, i32
  }
  func.func @transform_3(%arg0: i32) -> (i32, i32, i32) {
    %c0_i32 = arith.constant 0 : i32
    %c0_i32_0 = arith.constant 0 : i32
    %c0_i32_1 = arith.constant 0 : i32
    return %c0_i32, %arg0, %c0_i32_0 : i32, i32, i32
  }
}

</mosaic_0001>

<llo_original>
// kernel: tpu_custom_call.1
$region0: #{tpu_custom_call.1}
  #allocation0 [shape = 'u32[]', space=smem, size = 0x4, offset = 0x4, fixed_abs, tag = 'smem constant byte address 0x4 - core index']
  #allocation1 [shape = 'u32[144,128]{1,0:T(1,128)}', space=vmem, size = 0x12000, scoped, tag = 'internal scratch']
  %s0 = inlined_call_operand.vmem [shape: f32[8,2,4], index: 0, kind: input, shape index: {}]
  %s1 = inlined_call_operand.vmem [shape: f32[4,4], index: 1, kind: input, shape index: {}]
  %s2 = inlined_call_operand.vmem [shape: f32[1,4], index: 2, kind: input, shape index: {}]
  %s3 = inlined_call_operand.vmem [shape: f32[8,2,4], index: 3, kind: output, shape index: {}]
  %s4 = sld [smem:[#allocation0]]
  $region22: #{tpu_custom_call.1} parent=0
    _
  %s6 = ssub.s32 1, %s4
  %s7 = scalar_select 0, %s6, %s4
  // Predicated region
  $region2: #{tpu_custom_call.1} parent=0 // pred_check
    _
  $region3: #{tpu_custom_call.1} parent=0 // pred_check_branch
    %9 = sbr.rel (0) target = $region5
  $region4: #{tpu_custom_call.1} parent=0 // pred_region
    _
  $region5: #{tpu_custom_call.1} parent=0 // pred_fallthru
    _
  // Predicated region
  $region6: #{tpu_custom_call.1} parent=0 // pred_check
    _
  $region7: #{tpu_custom_call.1} parent=0 // pred_check_branch
    %11 = sbr.rel (0) target = $region9
  $region8: #{tpu_custom_call.1} parent=0 // pred_region
    _
  $region9: #{tpu_custom_call.1} parent=0 // pred_fallthru
    _
  // Predicated region
  $region10: #{tpu_custom_call.1} parent=0 // pred_check
    _
  $region11: #{tpu_custom_call.1} parent=0 // pred_check_branch
    %13 = sbr.rel (0) target = $region13
  $region12: #{tpu_custom_call.1} parent=0 // pred_region
    _
  $region13: #{tpu_custom_call.1} parent=0 // pred_fallthru
    _
  %v14 = vld [vmem:[%s1] sm:$0xf]
  %v15 = vld [vmem:[%s2] sm:$0x1]
  %v17 = vlaneseq
  %v18 = vshrl.u32 %v17, 7
  %v19 = vsub.s32 0, %v18
  %v20 = vrot.slane %v15, %v19
  %vm22 = vcmask 31744
  %v24 = vsel %vm22, 0.0, 0
  %vm26 = vcmask 1043456
  %v28 = vsel %vm26, %v14, 0
  %30 = vmatprep.subr.mxu0 0.0
  %31 = vmatpush1.msra.mxu0 %v28
  %32 = vmatprep.subr.mxu0 0.0
  %33 = vmatpush1.msra.mxu0 0.0
  %34 = vmatprep.subr.mxu0 0.0
  %35 = vmatpush1.msra.mxu0 0.0
  %36 = vmatprep.subr.mxu0 0.0
  %37 = vmatpush1.msra.mxu0 0.0
  %38 = vmatprep.subr.mxu0 0.0
  %39 = vmatpush1.msra.mxu0 0.0
  %40 = vmatprep.subr.mxu0 0.0
  %41 = vmatpush1.msra.mxu0 0.0
  %42 = vmatprep.subr.mxu0 0.0
  %43 = vmatpush1.msra.mxu0 0.0
  %44 = vmatprep.subr.mxu0 0.0
  %45 = vmatpush1.msra.mxu0 0.0
  %46 = vmatprep.subr.mxu0 0.0
  %47 = vmatpush1.msra.mxu0 0.0
  %48 = vmatprep.subr.mxu0 0.0
  %49 = vmatpush1.msra.mxu0 0.0
  %50 = vmatprep.subr.mxu0 0.0
  %51 = vmatpush1.msra.mxu0 0.0
  %52 = vmatprep.subr.mxu0 0.0
  %53 = vmatpush1.msra.mxu0 0.0
  %54 = vmatprep.subr.mxu0 0.0
  %55 = vmatpush1.msra.mxu0 0.0
  %56 = vmatprep.subr.mxu0 0.0
  %57 = vmatpush1.msra.mxu0 0.0
  %58 = vmatprep.subr.mxu0 0.0
  %59 = vmatpush1.msra.mxu0 0.0
  %60 = vmatprep.subr.mxu0 0.0
  %61 = vmatpush1.msra.mxu0 0.0
  %62 = vmatprep.subr.mxu0 0.0
  %63 = vmatpush1.msra.mxu0 0.0
  %64 = vmatprep.subr.mxu0 0.0
  %65 = vmatpush1.msra.mxu0 0.0
  %66 = vmatprep.subr.mxu0 0.0
  %67 = vmatpush1.msra.mxu0 0.0
  %68 = vmatprep.subr.mxu0 0.0
  %69 = vmatpush1.msra.mxu0 0.0
  %70 = vmatprep.subr.mxu0 0.0
  %71 = vmatpush1.msra.mxu0 0.0
  %72 = vmatprep.subr.mxu0 0.0
  %73 = vmatpush1.msra.mxu0 0.0
  %74 = vmatprep.subr.mxu0 0.0
  %75 = vmatpush1.msra.mxu0 0.0
  %76 = vmatprep.subr.mxu0 0.0
  %77 = vmatpush1.msra.mxu0 0.0
  %78 = vmatprep.subr.mxu0 0.0
  %79 = vmatpush1.msra.mxu0 0.0
  %80 = vmatprep.subr.mxu0 0.0
  %81 = vmatpush1.msra.mxu0 0.0
  %82 = vmatprep.subr.mxu0 0.0
  %83 = vmatpush1.msra.mxu0 0.0
  %84 = vmatprep.subr.mxu0 0.0
  %85 = vmatpush1.msra.mxu0 0.0
  %86 = vmatprep.subr.mxu0 0.0
  %87 = vmatpush1.msra.mxu0 0.0
  %88 = vmatprep.subr.mxu0 0.0
  %89 = vmatpush1.msra.mxu0 0.0
  %90 = vmatprep.subr.mxu0 0.0
  %91 = vmatpush1.msra.mxu0 0.0
  %92 = vmatprep.subr.mxu0 0.0
  %93 = vmatpush1.msra.mxu0 0.0
  %94 = vmatprep.mubr.f32.mxu0 0.0
  %95 = vmatmul.mubr.f32.gmra.mrb[0].mxu0 %v24
  %v96 = vpop.f32.mrb[0].mxu0
  %v97 = vadd.f32 %v20, %v96
  %v98 = vpop.f32.mrb[0].mxu0
  %99 = vdwg.mxu0
  %v100 = vmul.f32 %v97, 0.1
  %v101 = vadd.f32 %v100, 0.0
  %vm102 = vcmp.ge.f32.partialorder %v101, 1.0
  %v103 = vsel %vm102, 1.0, 0.0
  %v104 = vsub.f32 1.0, %v103
  %v105 = vmul.f32 %v104, %v101
  %v106 = vld [vmem:[%s0] sm:$0x3]
  %v107 = vmul.f32 %v106, 0.4
  %v108 = vmul.f32 %v103, 0.6
  %v109 = vadd.f32 %v107, %v108
  %vm110 = vcmask 25600
  %111 = vst.msk [vmem:[%s3] sm:$0x3] %vm110, %v109
  %v113 = vsel %vm22, %v109, 0
  %115 = vmatprep.subr.mxu0 0.0
  %116 = vmatpush1.msra.mxu0 %v28
  %117 = vmatprep.subr.mxu0 0.0
  %118 = vmatpush1.msra.mxu0 0.0
  %119 = vmatprep.subr.mxu0 0.0
  %120 = vmatpush1.msra.mxu0 0.0
  %121 = vmatprep.subr.mxu0 0.0
  %122 = vmatpush1.msra.mxu0 0.0
  %123 = vmatprep.subr.mxu0 0.0
  %124 = vmatpush1.msra.mxu0 0.0
  %125 = vmatprep.subr.mxu0 0.0
  %126 = vmatpush1.msra.mxu0 0.0
  %127 = vmatprep.subr.mxu0 0.0
  %128 = vmatpush1.msra.mxu0 0.0
  %129 = vmatprep.subr.mxu0 0.0
  %130 = vmatpush1.msra.mxu0 0.0
  %131 = vmatprep.subr.mxu0 0.0
  %132 = vmatpush1.msra.mxu0 0.0
  %133 = vmatprep.subr.mxu0 0.0
  %134 = vmatpush1.msra.mxu0 0.0
  %135 = vmatprep.subr.mxu0 0.0
  %136 = vmatpush1.msra.mxu0 0.0
  %137 = vmatprep.subr.mxu0 0.0
  %138 = vmatpush1.msra.mxu0 0.0
  %139 = vmatprep.subr.mxu0 0.0
  %140 = vmatpush1.msra.mxu0 0.0
  %141 = vmatprep.subr.mxu0 0.0
  %142 = vmatpush1.msra.mxu0 0.0
  %143 = vmatprep.subr.mxu0 0.0
  %144 = vmatpush1.msra.mxu0 0.0
  %145 = vmatprep.subr.mxu0 0.0
  %146 = vmatpush1.msra.mxu0 0.0
  %147 = vmatprep.subr.mxu0 0.0
  %148 = vmatpush1.msra.mxu0 0.0
  %149 = vmatprep.subr.mxu0 0.0
  %150 = vmatpush1.msra.mxu0 0.0
  %151 = vmatprep.subr.mxu0 0.0
  %152 = vmatpush1.msra.mxu0 0.0
  %153 = vmatprep.subr.mxu0 0.0
  %154 = vmatpush1.msra.mxu0 0.0
  %155 = vmatprep.subr.mxu0 0.0
  %156 = vmatpush1.msra.mxu0 0.0
  %157 = vmatprep.subr.mxu0 0.0
  %158 = vmatpush1.msra.mxu0 0.0
  %159 = vmatprep.subr.mxu0 0.0
  %160 = vmatpush1.msra.mxu0 0.0
  %161 = vmatprep.subr.mxu0 0.0
  %162 = vmatpush1.msra.mxu0 0.0
  %163 = vmatprep.subr.mxu0 0.0
  %164 = vmatpush1.msra.mxu0 0.0
  %165 = vmatprep.subr.mxu0 0.0
  %166 = vmatpush1.msra.mxu0 0.0
  %167 = vmatprep.subr.mxu0 0.0
  %168 = vmatpush1.msra.mxu0 0.0
  %169 = vmatprep.subr.mxu0 0.0
  %170 = vmatpush1.msra.mxu0 0.0
  %171 = vmatprep.subr.mxu0 0.0
  %172 = vmatpush1.msra.mxu0 0.0
  %173 = vmatprep.subr.mxu0 0.0
  %174 = vmatpush1.msra.mxu0 0.0
  %175 = vmatprep.subr.mxu0 0.0
  %176 = vmatpush1.msra.mxu0 0.0
  %177 = vmatprep.subr.mxu0 0.0
  %178 = vmatpush1.msra.mxu0 0.0
  %179 = vmatprep.mubr.f32.mxu0 0.0
  %180 = vmatmul.mubr.f32.gmra.mrb[0].mxu0 %v113
  %v181 = vpop.f32.mrb[0].mxu0
  %v182 = vadd.f32 %v20, %v181
  %v183 = vpop.f32.mrb[0].mxu0
  %184 = vdwg.mxu0
  %v185 = vsub.f32 %v182, %v105
  %v186 = vmul.f32 %v185, 0.1
  %v187 = vadd.f32 %v105, %v186
  %vm188 = vcmp.ge.f32.partialorder %v187, 1.0
  %v189 = vsel %vm188, 1.0, 0.0
  %v190 = vsub.f32 1.0, %v189
  %v191 = vmul.f32 %v190, %v187
  %s192 = scalar_lea.vmem %s0, 2
  %v193 = vld [vmem:[%s192] sm:$0x3]
  %v194 = vmul.f32 %v193, 0.4
  %v195 = vmul.f32 %v189, 0.6
  %v196 = vadd.f32 %v194, %v195
  %s197 = scalar_lea.vmem %s3, 2
  %198 = vst.msk [vmem:[%s197] sm:$0x3] %vm110, %v196
  %v200 = vsel %vm22, %v196, 0
  %202 = vmatprep.subr.mxu0 0.0
  %203 = vmatpush1.msra.mxu0 %v28
  %204 = vmatprep.subr.mxu0 0.0
  %205 = vmatpush1.msra.mxu0 0.0
  %206 = vmatprep.subr.mxu0 0.0
  %207 = vmatpush1.msra.mxu0 0.0
  %208 = vmatprep.subr.mxu0 0.0
  %209 = vmatpush1.msra.mxu0 0.0
  %210 = vmatprep.subr.mxu0 0.0
  %211 = vmatpush1.msra.mxu0 0.0
  %212 = vmatprep.subr.mxu0 0.0
  %213 = vmatpush1.msra.mxu0 0.0
  %214 = vmatprep.subr.mxu0 0.0
  %215 = vmatpush1.msra.mxu0 0.0
  %216 = vmatprep.subr.mxu0 0.0
  %217 = vmatpush1.msra.mxu0 0.0
  %218 = vmatprep.subr.mxu0 0.0
  %219 = vmatpush1.msra.mxu0 0.0
  %220 = vmatprep.subr.mxu0 0.0
  %221 = vmatpush1.msra.mxu0 0.0
  %222 = vmatprep.subr.mxu0 0.0
  %223 = vmatpush1.msra.mxu0 0.0
  %224 = vmatprep.subr.mxu0 0.0
  %225 = vmatpush1.msra.mxu0 0.0
  %226 = vmatprep.subr.mxu0 0.0
  %227 = vmatpush1.msra.mxu0 0.0
  %228 = vmatprep.subr.mxu0 0.0
  %229 = vmatpush1.msra.mxu0 0.0
  %230 = vmatprep.subr.mxu0 0.0
  %231 = vmatpush1.msra.mxu0 0.0
  %232 = vmatprep.subr.mxu0 0.0
  %233 = vmatpush1.msra.mxu0 0.0
  %234 = vmatprep.subr.mxu0 0.0
  %235 = vmatpush1.msra.mxu0 0.0
  %236 = vmatprep.subr.mxu0 0.0
  %237 = vmatpush1.msra.mxu0 0.0
  %238 = vmatprep.subr.mxu0 0.0
  %239 = vmatpush1.msra.mxu0 0.0
  %240 = vmatprep.subr.mxu0 0.0
  %241 = vmatpush1.msra.mxu0 0.0
  %242 = vmatprep.subr.mxu0 0.0
  %243 = vmatpush1.msra.mxu0 0.0
  %244 = vmatprep.subr.mxu0 0.0
  %245 = vmatpush1.msra.mxu0 0.0
  %246 = vmatprep.subr.mxu0 0.0
  %247 = vmatpush1.msra.mxu0 0.0
  %248 = vmatprep.subr.mxu0 0.0
  %249 = vmatpush1.msra.mxu0 0.0
  %250 = vmatprep.subr.mxu0 0.0
  %251 = vmatpush1.msra.mxu0 0.0
  %252 = vmatprep.subr.mxu0 0.0
  %253 = vmatpush1.msra.mxu0 0.0
  %254 = vmatprep.subr.mxu0 0.0
  %255 = vmatpush1.msra.mxu0 0.0
  %256 = vmatprep.subr.mxu0 0.0
  %257 = vmatpush1.msra.mxu0 0.0
  %258 = vmatprep.subr.mxu0 0.0
  %259 = vmatpush1.msra.mxu0 0.0
  %260 = vmatprep.subr.mxu0 0.0
  %261 = vmatpush1.msra.mxu0 0.0
  %262 = vmatprep.subr.mxu0 0.0
  %263 = vmatpush1.msra.mxu0 0.0
  %264 = vmatprep.subr.mxu0 0.0
  %265 = vmatpush1.msra.mxu0 0.0
  %266 = vmatprep.mubr.f32.mxu0 0.0
  %267 = vmatmul.mubr.f32.gmra.mrb[0].mxu0 %v200
  %v268 = vpop.f32.mrb[0].mxu0
  %v269 = vadd.f32 %v20, %v268
  %v270 = vpop.f32.mrb[0].mxu0
  %271 = vdwg.mxu0
  %v272 = vsub.f32 %v269, %v191
  %v273 = vmul.f32 %v272, 0.1
  %v274 = vadd.f32 %v191, %v273
  %vm275 = vcmp.ge.f32.partialorder %v274, 1.0
  %v276 = vsel %vm275, 1.0, 0.0
  %v277 = vsub.f32 1.0, %v276
  %v278 = vmul.f32 %v277, %v274
  %s279 = scalar_lea.vmem %s0, 4
  %v280 = vld [vmem:[%s279] sm:$0x3]
  %v281 = vmul.f32 %v280, 0.4
  %v282 = vmul.f32 %v276, 0.6
  %v283 = vadd.f32 %v281, %v282
  %s284 = scalar_lea.vmem %s3, 4
  %285 = vst.msk [vmem:[%s284] sm:$0x3] %vm110, %v283
  %v287 = vsel %vm22, %v283, 0
  %289 = vmatprep.subr.mxu0 0.0
  %290 = vmatpush1.msra.mxu0 %v28
  %291 = vmatprep.subr.mxu0 0.0
  %292 = vmatpush1.msra.mxu0 0.0
  %293 = vmatprep.subr.mxu0 0.0
  %294 = vmatpush1.msra.mxu0 0.0
  %295 = vmatprep.subr.mxu0 0.0
  %296 = vmatpush1.msra.mxu0 0.0
  %297 = vmatprep.subr.mxu0 0.0
  %298 = vmatpush1.msra.mxu0 0.0
  %299 = vmatprep.subr.mxu0 0.0
  %300 = vmatpush1.msra.mxu0 0.0
  %301 = vmatprep.subr.mxu0 0.0
  %302 = vmatpush1.msra.mxu0 0.0
  %303 = vmatprep.subr.mxu0 0.0
  %304 = vmatpush1.msra.mxu0 0.0
  %305 = vmatprep.subr.mxu0 0.0
  %306 = vmatpush1.msra.mxu0 0.0
  %307 = vmatprep.subr.mxu0 0.0
  %308 = vmatpush1.msra.mxu0 0.0
  %309 = vmatprep.subr.mxu0 0.0
  %310 = vmatpush1.msra.mxu0 0.0
  %311 = vmatprep.subr.mxu0 0.0
  %312 = vmatpush1.msra.mxu0 0.0
  %313 = vmatprep.subr.mxu0 0.0
  %314 = vmatpush1.msra.mxu0 0.0
  %315 = vmatprep.subr.mxu0 0.0
  %316 = vmatpush1.msra.mxu0 0.0
  %317 = vmatprep.subr.mxu0 0.0
  %318 = vmatpush1.msra.mxu0 0.0
  %319 = vmatprep.subr.mxu0 0.0
  %320 = vmatpush1.msra.mxu0 0.0
  %321 = vmatprep.subr.mxu0 0.0
  %322 = vmatpush1.msra.mxu0 0.0
  %323 = vmatprep.subr.mxu0 0.0
  %324 = vmatpush1.msra.mxu0 0.0
  %325 = vmatprep.subr.mxu0 0.0
  %326 = vmatpush1.msra.mxu0 0.0
  %327 = vmatprep.subr.mxu0 0.0
  %328 = vmatpush1.msra.mxu0 0.0
  %329 = vmatprep.subr.mxu0 0.0
  %330 = vmatpush1.msra.mxu0 0.0
  %331 = vmatprep.subr.mxu0 0.0
  %332 = vmatpush1.msra.mxu0 0.0
  %333 = vmatprep.subr.mxu0 0.0
  %334 = vmatpush1.msra.mxu0 0.0
  %335 = vmatprep.subr.mxu0 0.0
  %336 = vmatpush1.msra.mxu0 0.0
  %337 = vmatprep.subr.mxu0 0.0
  %338 = vmatpush1.msra.mxu0 0.0
  %339 = vmatprep.subr.mxu0 0.0
  %340 = vmatpush1.msra.mxu0 0.0
  %341 = vmatprep.subr.mxu0 0.0
  %342 = vmatpush1.msra.mxu0 0.0
  %343 = vmatprep.subr.mxu0 0.0
  %344 = vmatpush1.msra.mxu0 0.0
  %345 = vmatprep.subr.mxu0 0.0
  %346 = vmatpush1.msra.mxu0 0.0
  %347 = vmatprep.subr.mxu0 0.0
  %348 = vmatpush1.msra.mxu0 0.0
  %349 = vmatprep.subr.mxu0 0.0
  %350 = vmatpush1.msra.mxu0 0.0
  %351 = vmatprep.subr.mxu0 0.0
  %352 = vmatpush1.msra.mxu0 0.0
  %353 = vmatprep.mubr.f32.mxu0 0.0
  %354 = vmatmul.mubr.f32.gmra.mrb[0].mxu0 %v287
  %v355 = vpop.f32.mrb[0].mxu0
  %v356 = vadd.f32 %v20, %v355
  %v357 = vpop.f32.mrb[0].mxu0
  %358 = vdwg.mxu0
  %v359 = vsub.f32 %v356, %v278
  %v360 = vmul.f32 %v359, 0.1
  %v361 = vadd.f32 %v278, %v360
  %vm362 = vcmp.ge.f32.partialorder %v361, 1.0
  %v363 = vsel %vm362, 1.0, 0.0
  %v364 = vsub.f32 1.0, %v363
  %v365 = vmul.f32 %v364, %v361
  %s366 = scalar_lea.vmem %s0, 6
  %v367 = vld [vmem:[%s366] sm:$0x3]
  %v368 = vmul.f32 %v367, 0.4
  %v369 = vmul.f32 %v363, 0.6
  %v370 = vadd.f32 %v368, %v369
  %s371 = scalar_lea.vmem %s3, 6
  %372 = vst.msk [vmem:[%s371] sm:$0x3] %vm110, %v370
  %v374 = vsel %vm22, %v370, 0
  %376 = vmatprep.subr.mxu0 0.0
  %377 = vmatpush1.msra.mxu0 %v28
  %378 = vmatprep.subr.mxu0 0.0
  %379 = vmatpush1.msra.mxu0 0.0
  %380 = vmatprep.subr.mxu0 0.0
  %381 = vmatpush1.msra.mxu0 0.0
  %382 = vmatprep.subr.mxu0 0.0
  %383 = vmatpush1.msra.mxu0 0.0
  %384 = vmatprep.subr.mxu0 0.0
  %385 = vmatpush1.msra.mxu0 0.0
  %386 = vmatprep.subr.mxu0 0.0
  %387 = vmatpush1.msra.mxu0 0.0
  %388 = vmatprep.subr.mxu0 0.0
  %389 = vmatpush1.msra.mxu0 0.0
  %390 = vmatprep.subr.mxu0 0.0
  %391 = vmatpush1.msra.mxu0 0.0
  %392 = vmatprep.subr.mxu0 0.0
  %393 = vmatpush1.msra.mxu0 0.0
  %394 = vmatprep.subr.mxu0 0.0
  %395 = vmatpush1.msra.mxu0 0.0
  %396 = vmatprep.subr.mxu0 0.0
  %397 = vmatpush1.msra.mxu0 0.0
  %398 = vmatprep.subr.mxu0 0.0
  %399 = vmatpush1.msra.mxu0 0.0
  %400 = vmatprep.subr.mxu0 0.0
  %401 = vmatpush1.msra.mxu0 0.0
  %402 = vmatprep.subr.mxu0 0.0
  %403 = vmatpush1.msra.mxu0 0.0
  %404 = vmatprep.subr.mxu0 0.0
  %405 = vmatpush1.msra.mxu0 0.0
  %406 = vmatprep.subr.mxu0 0.0
  %407 = vmatpush1.msra.mxu0 0.0
  %408 = vmatprep.subr.mxu0 0.0
  %409 = vmatpush1.msra.mxu0 0.0
  %410 = vmatprep.subr.mxu0 0.0
  %411 = vmatpush1.msra.mxu0 0.0
  %412 = vmatprep.subr.mxu0 0.0
  %413 = vmatpush1.msra.mxu0 0.0
  %414 = vmatprep.subr.mxu0 0.0
  %415 = vmatpush1.msra.mxu0 0.0
  %416 = vmatprep.subr.mxu0 0.0
  %417 = vmatpush1.msra.mxu0 0.0
  %418 = vmatprep.subr.mxu0 0.0
  %419 = vmatpush1.msra.mxu0 0.0
  %420 = vmatprep.subr.mxu0 0.0
  %421 = vmatpush1.msra.mxu0 0.0
  %422 = vmatprep.subr.mxu0 0.0
  %423 = vmatpush1.msra.mxu0 0.0
  %424 = vmatprep.subr.mxu0 0.0
  %425 = vmatpush1.msra.mxu0 0.0
  %426 = vmatprep.subr.mxu0 0.0
  %427 = vmatpush1.msra.mxu0 0.0
  %428 = vmatprep.subr.mxu0 0.0
  %429 = vmatpush1.msra.mxu0 0.0
  %430 = vmatprep.subr.mxu0 0.0
  %431 = vmatpush1.msra.mxu0 0.0
  %432 = vmatprep.subr.mxu0 0.0
  %433 = vmatpush1.msra.mxu0 0.0
  %434 = vmatprep.subr.mxu0 0.0
  %435 = vmatpush1.msra.mxu0 0.0
  %436 = vmatprep.subr.mxu0 0.0
  %437 = vmatpush1.msra.mxu0 0.0
  %438 = vmatprep.subr.mxu0 0.0
  %439 = vmatpush1.msra.mxu0 0.0
  %440 = vmatprep.mubr.f32.mxu0 0.0
  %441 = vmatmul.mubr.f32.gmra.mrb[0].mxu0 %v374
  %v442 = vpop.f32.mrb[0].mxu0
  %v443 = vadd.f32 %v20, %v442
  %v444 = vpop.f32.mrb[0].mxu0
  %445 = vdwg.mxu0
  %v446 = vsub.f32 %v443, %v365
  %v447 = vmul.f32 %v446, 0.1
  %v448 = vadd.f32 %v365, %v447
  %vm449 = vcmp.ge.f32.partialorder %v448, 1.0
  %v450 = vsel %vm449, 1.0, 0.0
  %v451 = vsub.f32 1.0, %v450
  %v452 = vmul.f32 %v451, %v448
  %s453 = scalar_lea.vmem %s0, 8
  %v454 = vld [vmem:[%s453] sm:$0x3]
  %v455 = vmul.f32 %v454, 0.4
  %v456 = vmul.f32 %v450, 0.6
  %v457 = vadd.f32 %v455, %v456
  %s458 = scalar_lea.vmem %s3, 8
  %459 = vst.msk [vmem:[%s458] sm:$0x3] %vm110, %v457
  %v461 = vsel %vm22, %v457, 0
  %463 = vmatprep.subr.mxu0 0.0
  %464 = vmatpush1.msra.mxu0 %v28
  %465 = vmatprep.subr.mxu0 0.0
  %466 = vmatpush1.msra.mxu0 0.0
  %467 = vmatprep.subr.mxu0 0.0
  %468 = vmatpush1.msra.mxu0 0.0
  %469 = vmatprep.subr.mxu0 0.0
  %470 = vmatpush1.msra.mxu0 0.0
  %471 = vmatprep.subr.mxu0 0.0
  %472 = vmatpush1.msra.mxu0 0.0
  %473 = vmatprep.subr.mxu0 0.0
  %474 = vmatpush1.msra.mxu0 0.0
  %475 = vmatprep.subr.mxu0 0.0
  %476 = vmatpush1.msra.mxu0 0.0
  %477 = vmatprep.subr.mxu0 0.0
  %478 = vmatpush1.msra.mxu0 0.0
  %479 = vmatprep.subr.mxu0 0.0
  %480 = vmatpush1.msra.mxu0 0.0
  %481 = vmatprep.subr.mxu0 0.0
  %482 = vmatpush1.msra.mxu0 0.0
  %483 = vmatprep.subr.mxu0 0.0
  %484 = vmatpush1.msra.mxu0 0.0
  %485 = vmatprep.subr.mxu0 0.0
  %486 = vmatpush1.msra.mxu0 0.0
  %487 = vmatprep.subr.mxu0 0.0
  %488 = vmatpush1.msra.mxu0 0.0
  %489 = vmatprep.subr.mxu0 0.0
  %490 = vmatpush1.msra.mxu0 0.0
  %491 = vmatprep.subr.mxu0 0.0
  %492 = vmatpush1.msra.mxu0 0.0
  %493 = vmatprep.subr.mxu0 0.0
  %494 = vmatpush1.msra.mxu0 0.0
  %495 = vmatprep.subr.mxu0 0.0
  %496 = vmatpush1.msra.mxu0 0.0
  %497 = vmatprep.subr.mxu0 0.0
  %498 = vmatpush1.msra.mxu0 0.0
  %499 = vmatprep.subr.mxu0 0.0
  %500 = vmatpush1.msra.mxu0 0.0
  %501 = vmatprep.subr.mxu0 0.0
  %502 = vmatpush1.msra.mxu0 0.0
  %503 = vmatprep.subr.mxu0 0.0
  %504 = vmatpush1.msra.mxu0 0.0
  %505 = vmatprep.subr.mxu0 0.0
  %506 = vmatpush1.msra.mxu0 0.0
  %507 = vmatprep.subr.mxu0 0.0
  %508 = vmatpush1.msra.mxu0 0.0
  %509 = vmatprep.subr.mxu0 0.0
  %510 = vmatpush1.msra.mxu0 0.0
  %511 = vmatprep.subr.mxu0 0.0
  %512 = vmatpush1.msra.mxu0 0.0
  %513 = vmatprep.subr.mxu0 0.0
  %514 = vmatpush1.msra.mxu0 0.0
  %515 = vmatprep.subr.mxu0 0.0
  %516 = vmatpush1.msra.mxu0 0.0
  %517 = vmatprep.subr.mxu0 0.0
  %518 = vmatpush1.msra.mxu0 0.0
  %519 = vmatprep.subr.mxu0 0.0
  %520 = vmatpush1.msra.mxu0 0.0
  %521 = vmatprep.subr.mxu0 0.0
  %522 = vmatpush1.msra.mxu0 0.0
  %523 = vmatprep.subr.mxu0 0.0
  %524 = vmatpush1.msra.mxu0 0.0
  %525 = vmatprep.subr.mxu0 0.0
  %526 = vmatpush1.msra.mxu0 0.0
  %527 = vmatprep.mubr.f32.mxu0 0.0
  %528 = vmatmul.mubr.f32.gmra.mrb[0].mxu0 %v461
  %v529 = vpop.f32.mrb[0].mxu0
  %v530 = vadd.f32 %v20, %v529
  %v531 = vpop.f32.mrb[0].mxu0
  %532 = vdwg.mxu0
  %v533 = vsub.f32 %v530, %v452
  %v534 = vmul.f32 %v533, 0.1
  %v535 = vadd.f32 %v452, %v534
  %vm536 = vcmp.ge.f32.partialorder %v535, 1.0
  %v537 = vsel %vm536, 1.0, 0.0
  %v538 = vsub.f32 1.0, %v537
  %v539 = vmul.f32 %v538, %v535
  %s540 = scalar_lea.vmem %s0, 10
  %v541 = vld [vmem:[%s540] sm:$0x3]
  %v542 = vmul.f32 %v541, 0.4
  %v543 = vmul.f32 %v537, 0.6
  %v544 = vadd.f32 %v542, %v543
  %s545 = scalar_lea.vmem %s3, 10
  %546 = vst.msk [vmem:[%s545] sm:$0x3] %vm110, %v544
  %v548 = vsel %vm22, %v544, 0
  %550 = vmatprep.subr.mxu0 0.0
  %551 = vmatpush1.msra.mxu0 %v28
  %552 = vmatprep.subr.mxu0 0.0
  %553 = vmatpush1.msra.mxu0 0.0
  %554 = vmatprep.subr.mxu0 0.0
  %555 = vmatpush1.msra.mxu0 0.0
  %556 = vmatprep.subr.mxu0 0.0
  %557 = vmatpush1.msra.mxu0 0.0
  %558 = vmatprep.subr.mxu0 0.0
  %559 = vmatpush1.msra.mxu0 0.0
  %560 = vmatprep.subr.mxu0 0.0
  %561 = vmatpush1.msra.mxu0 0.0
  %562 = vmatprep.subr.mxu0 0.0
  %563 = vmatpush1.msra.mxu0 0.0
  %564 = vmatprep.subr.mxu0 0.0
  %565 = vmatpush1.msra.mxu0 0.0
  %566 = vmatprep.subr.mxu0 0.0
  %567 = vmatpush1.msra.mxu0 0.0
  %568 = vmatprep.subr.mxu0 0.0
  %569 = vmatpush1.msra.mxu0 0.0
  %570 = vmatprep.subr.mxu0 0.0
  %571 = vmatpush1.msra.mxu0 0.0
  %572 = vmatprep.subr.mxu0 0.0
  %573 = vmatpush1.msra.mxu0 0.0
  %574 = vmatprep.subr.mxu0 0.0
  %575 = vmatpush1.msra.mxu0 0.0
  %576 = vmatprep.subr.mxu0 0.0
  %577 = vmatpush1.msra.mxu0 0.0
  %578 = vmatprep.subr.mxu0 0.0
  %579 = vmatpush1.msra.mxu0 0.0
  %580 = vmatprep.subr.mxu0 0.0
  %581 = vmatpush1.msra.mxu0 0.0
  %582 = vmatprep.subr.mxu0 0.0
  %583 = vmatpush1.msra.mxu0 0.0
  %584 = vmatprep.subr.mxu0 0.0
  %585 = vmatpush1.msra.mxu0 0.0
  %586 = vmatprep.subr.mxu0 0.0
  %587 = vmatpush1.msra.mxu0 0.0
  %588 = vmatprep.subr.mxu0 0.0
  %589 = vmatpush1.msra.mxu0 0.0
  %590 = vmatprep.subr.mxu0 0.0
  %591 = vmatpush1.msra.mxu0 0.0
  %592 = vmatprep.subr.mxu0 0.0
  %593 = vmatpush1.msra.mxu0 0.0
  %594 = vmatprep.subr.mxu0 0.0
  %595 = vmatpush1.msra.mxu0 0.0
  %596 = vmatprep.subr.mxu0 0.0
  %597 = vmatpush1.msra.mxu0 0.0
  %598 = vmatprep.subr.mxu0 0.0
  %599 = vmatpush1.msra.mxu0 0.0
  %600 = vmatprep.subr.mxu0 0.0
  %601 = vmatpush1.msra.mxu0 0.0
  %602 = vmatprep.subr.mxu0 0.0
  %603 = vmatpush1.msra.mxu0 0.0
  %604 = vmatprep.subr.mxu0 0.0
  %605 = vmatpush1.msra.mxu0 0.0
  %606 = vmatprep.subr.mxu0 0.0
  %607 = vmatpush1.msra.mxu0 0.0
  %608 = vmatprep.subr.mxu0 0.0
  %609 = vmatpush1.msra.mxu0 0.0
  %610 = vmatprep.subr.mxu0 0.0
  %611 = vmatpush1.msra.mxu0 0.0
  %612 = vmatprep.subr.mxu0 0.0
  %613 = vmatpush1.msra.mxu0 0.0
  %614 = vmatprep.mubr.f32.mxu0 0.0
  %615 = vmatmul.mubr.f32.gmra.mrb[0].mxu0 %v548
  %v616 = vpop.f32.mrb[0].mxu0
  %v617 = vadd.f32 %v20, %v616
  %v618 = vpop.f32.mrb[0].mxu0
  %619 = vdwg.mxu0
  %v620 = vsub.f32 %v617, %v539
  %v621 = vmul.f32 %v620, 0.1
  %v622 = vadd.f32 %v539, %v621
  %vm623 = vcmp.ge.f32.partialorder %v622, 1.0
  %v624 = vsel %vm623, 1.0, 0.0
  %v625 = vsub.f32 1.0, %v624
  %v626 = vmul.f32 %v625, %v622
  %s627 = scalar_lea.vmem %s0, 12
  %v628 = vld [vmem:[%s627] sm:$0x3]
  %v629 = vmul.f32 %v628, 0.4
  %v630 = vmul.f32 %v624, 0.6
  %v631 = vadd.f32 %v629, %v630
  %s632 = scalar_lea.vmem %s3, 12
  %633 = vst.msk [vmem:[%s632] sm:$0x3] %vm110, %v631
  %v635 = vsel %vm22, %v631, 0
  %637 = vmatprep.subr.mxu0 0.0
  %638 = vmatpush1.msra.mxu0 %v28
  %639 = vmatprep.subr.mxu0 0.0
  %640 = vmatpush1.msra.mxu0 0.0
  %641 = vmatprep.subr.mxu0 0.0
  %642 = vmatpush1.msra.mxu0 0.0
  %643 = vmatprep.subr.mxu0 0.0
  %644 = vmatpush1.msra.mxu0 0.0
  %645 = vmatprep.subr.mxu0 0.0
  %646 = vmatpush1.msra.mxu0 0.0
  %647 = vmatprep.subr.mxu0 0.0
  %648 = vmatpush1.msra.mxu0 0.0
  %649 = vmatprep.subr.mxu0 0.0
  %650 = vmatpush1.msra.mxu0 0.0
  %651 = vmatprep.subr.mxu0 0.0
  %652 = vmatpush1.msra.mxu0 0.0
  %653 = vmatprep.subr.mxu0 0.0
  %654 = vmatpush1.msra.mxu0 0.0
  %655 = vmatprep.subr.mxu0 0.0
  %656 = vmatpush1.msra.mxu0 0.0
  %657 = vmatprep.subr.mxu0 0.0
  %658 = vmatpush1.msra.mxu0 0.0
  %659 = vmatprep.subr.mxu0 0.0
  %660 = vmatpush1.msra.mxu0 0.0
  %661 = vmatprep.subr.mxu0 0.0
  %662 = vmatpush1.msra.mxu0 0.0
  %663 = vmatprep.subr.mxu0 0.0
  %664 = vmatpush1.msra.mxu0 0.0
  %665 = vmatprep.subr.mxu0 0.0
  %666 = vmatpush1.msra.mxu0 0.0
  %667 = vmatprep.subr.mxu0 0.0
  %668 = vmatpush1.msra.mxu0 0.0
  %669 = vmatprep.subr.mxu0 0.0
  %670 = vmatpush1.msra.mxu0 0.0
  %671 = vmatprep.subr.mxu0 0.0
  %672 = vmatpush1.msra.mxu0 0.0
  %673 = vmatprep.subr.mxu0 0.0
  %674 = vmatpush1.msra.mxu0 0.0
  %675 = vmatprep.subr.mxu0 0.0
  %676 = vmatpush1.msra.mxu0 0.0
  %677 = vmatprep.subr.mxu0 0.0
  %678 = vmatpush1.msra.mxu0 0.0
  %679 = vmatprep.subr.mxu0 0.0
  %680 = vmatpush1.msra.mxu0 0.0
  %681 = vmatprep.subr.mxu0 0.0
  %682 = vmatpush1.msra.mxu0 0.0
  %683 = vmatprep.subr.mxu0 0.0
  %684 = vmatpush1.msra.mxu0 0.0
  %685 = vmatprep.subr.mxu0 0.0
  %686 = vmatpush1.msra.mxu0 0.0
  %687 = vmatprep.subr.mxu0 0.0
  %688 = vmatpush1.msra.mxu0 0.0
  %689 = vmatprep.subr.mxu0 0.0
  %690 = vmatpush1.msra.mxu0 0.0
  %691 = vmatprep.subr.mxu0 0.0
  %692 = vmatpush1.msra.mxu0 0.0
  %693 = vmatprep.subr.mxu0 0.0
  %694 = vmatpush1.msra.mxu0 0.0
  %695 = vmatprep.subr.mxu0 0.0
  %696 = vmatpush1.msra.mxu0 0.0
  %697 = vmatprep.subr.mxu0 0.0
  %698 = vmatpush1.msra.mxu0 0.0
  %699 = vmatprep.subr.mxu0 0.0
  %700 = vmatpush1.msra.mxu0 0.0
  %701 = vmatprep.mubr.f32.mxu0 0.0
  %702 = vmatmul.mubr.f32.gmra.mrb[0].mxu0 %v635
  %v703 = vpop.f32.mrb[0].mxu0
  %v704 = vadd.f32 %v20, %v703
  %v705 = vpop.f32.mrb[0].mxu0
  %706 = vdwg.mxu0
  %v707 = vsub.f32 %v704, %v626
  %v708 = vmul.f32 %v707, 0.1
  %v709 = vadd.f32 %v626, %v708
  %vm710 = vcmp.ge.f32.partialorder %v709, 1.0
  %v711 = vsel %vm710, 1.0, 0.0
  %s712 = scalar_lea.vmem %s0, 14
  %v713 = vld [vmem:[%s712] sm:$0x3]
  %v714 = vmul.f32 %v713, 0.4
  %v715 = vmul.f32 %v711, 0.6
  %v716 = vadd.f32 %v714, %v715
  %s717 = scalar_lea.vmem %s3, 14
  %718 = vst.msk [vmem:[%s717] sm:$0x3] %vm110, %v716
  // Predicated region
  $region14: #{tpu_custom_call.1} parent=0 // pred_check
    _
  $region15: #{tpu_custom_call.1} parent=0 // pred_check_branch
    %720 = sbr.rel (0) target = $region17
  $region16: #{tpu_custom_call.1} parent=0 // pred_region
    _
  $region17: #{tpu_custom_call.1} parent=0 // pred_fallthru
    _
  // Predicated region
  $region18: #{tpu_custom_call.1} parent=0 // pred_check
    _
  $region19: #{tpu_custom_call.1} parent=0 // pred_check_branch
    %722 = sbr.rel (0) target = $region21
  $region20: #{tpu_custom_call.1} parent=0 // pred_region
    _
  $region21: #{tpu_custom_call.1} parent=0 // pred_fallthru
    _

</llo_original>
